<compile_context>
chip_gen: v6e
topology: v6e:2x2x1
jax: 0.10.0
libtpu: 0.0.40
codegen_flags: <defaults>
</compile_context>

<pallas_src>
import functools

import jax
import jax.numpy as jnp
from jax.experimental import pallas as pl
from jax.experimental.pallas import tpu as pltpu

EPS = 1e-5  # UnitGaussianNormalizer eps

# Per-step VMEM budget used to pick the lane-tile width (keeps the
# double-buffered footprint well under the 32 MiB scoped default and v7x's
# 64 MiB physical VMEM).
_VMEM_BUDGET_BYTES = 16 * 1024 * 1024


def _fused_kernel(x_ref, pos_ref, xp_ref, wb_ref, xpre_ref, out_ref, *, c_in):
  """One (batch, lane-tile) grid step.

  x_ref    : (C_in, TL)        raw input slab (channels x spatial lanes)
  pos_ref  : (2, TL)           precomputed positional channels (i/H, j/W)
  xp_ref   : (C_in, 2)         packed in-normalizer params [1/(std+eps), mean/(std+eps)]
  wb_ref   : (C_out, C_in+3)   packed [W_eff | b_eff] with out-decode folded in
  xpre_ref : (C_in + 2, TL)    preprocessed (normalized + pos-encoded) x
  out_ref  : (C_out, TL)       decoded model output
  """
  xp = xp_ref[...]
  x_scale = xp[:, 0:1]                     # (C_in, 1)
  x_shift = xp[:, 1:2]                     # (C_in, 1)

  # --- in_normalizer.transform(x) as a single FMA ---
  xn = x_ref[...] * x_scale - x_shift      # (C_in, TL) f32

  # --- PositionalEmbedding2D + patcher.patch (identity at levels=0) ---
  # 6-sublane concat: one vreg of work.  The *stored* (cast) activation is the
  # one fed to the model, matching the reference even if I/O dtype is bf16.
  xpre = jnp.concatenate([xn, pos_ref[...].astype(xn.dtype)], axis=0)
  xpre = xpre.astype(xpre_ref.dtype)       # (C_in + 2, TL)
  xpre_ref[...] = xpre

  # --- wrapped model (1x1 conv over channels) with
  #     out_normalizer.inverse_transform folded into W_eff / b_eff ---
  wb = wb_ref[...]
  w = wb[:, : c_in + 2]                    # (C_out, C_in+2)
  b = wb[:, c_in + 2 : c_in + 3]           # (C_out, 1)
  out = jnp.dot(w, xpre, preferred_element_type=jnp.float32) + b
  out_ref[...] = out.astype(out_ref.dtype)


def _pick_lane_tile(hw, per_lane_bytes, budget_bytes):
  """Largest multiple of 128 that divides hw and fits the VMEM budget."""
  assert hw % 128 == 0, "H*W must be a multiple of 128 for lane-dense tiling"
  cap = max(128, (budget_bytes // per_lane_bytes) // 128 * 128)
  tl = min(hw, cap)
  while hw % tl:
    tl -= 128
  return tl


class MGPatchingDataProcessorPallas:
  """JAX/Pallas equivalent of MGPatchingDataProcessor (levels=0 configuration)."""

  def __init__(self, levels, padding_fraction, stitching, *,
               in_channels, out_channels, key):
    assert levels == 0 and padding_fraction == 0.0, (
        "only the skip-padding configuration (identity patch/unpatch) is implemented")
    self.levels = levels
    self.padding_fraction = padding_fraction
    self.stitching = stitching
    self.c_in = in_channels
    self.c_out = out_channels

    ks = jax.random.split(key, 6)
    # UnitGaussianNormalizer-style per-channel statistics (deterministic synthetic).
    self.x_mean = (0.1 * jax.random.normal(ks[0], (in_channels, 1))).astype(jnp.float32)
    self.x_std = jax.random.uniform(
        ks[1], (in_channels, 1), minval=0.5, maxval=1.5).astype(jnp.float32)
    self.y_mean = (0.1 * jax.random.normal(ks[2], (out_channels, 1))).astype(jnp.float32)
    self.y_std = jax.random.uniform(
        ks[3], (out_channels, 1), minval=0.5, maxval=1.5).astype(jnp.float32)

    # Synthetic wrapped model: pointwise (1x1) conv, NCHW, on C_in + 2 pos channels.
    fan_in = in_channels + 2
    self.weight = (jax.random.normal(ks[4], (out_channels, fan_in))
                   / jnp.sqrt(fan_in)).astype(jnp.float32)
    self.bias = (0.01 * jax.random.normal(ks[5], (out_channels, 1))).astype(jnp.float32)

    # ---- fold normalizer algebra into packed kernel parameters (host, once) ----
    x_invstd = 1.0 / (self.x_std + EPS)
    # (C_in, 2): column 0 = 1/(std+eps), column 1 = mean/(std+eps)
    self.x_params = jnp.concatenate(
        [x_invstd, self.x_mean * x_invstd], axis=1).astype(jnp.float32)

    y_stdeps = self.y_std + EPS
    w_eff = y_stdeps * self.weight                      # (C_out, C_in+2)
    b_eff = y_stdeps * self.bias + self.y_mean          # (C_out, 1)
    # (C_out, C_in+3): [W_eff | b_eff]
    self.wb = jnp.concatenate([w_eff, b_eff], axis=1).astype(jnp.float32)

  def forward(self, x, y):
    B, C_in, H, W = x.shape
    _, C_out, _, _ = y.shape
    assert C_in == self.c_in and C_out == self.c_out
    HW = H * W

    # Free, row-major reshape: batch stays a grid axis, no host transposes.
    x3 = x.reshape(B, C_in, HW)

    # Positional channels (batch-independent), computed once as (2, HW).
    gi = jnp.repeat(jnp.arange(H, dtype=x.dtype) / H, W)   # row index / H
    gj = jnp.tile(jnp.arange(W, dtype=x.dtype) / W, H)     # col index / W
    pos = jnp.stack([gi, gj], axis=0)                      # (2, HW)

    # Lane-tile width from a VMEM budget (double-buffered per stream).
    per_lane_bytes = 2 * 4 * (C_in + 2 + (C_in + 2) + C_out)
    TL = _pick_lane_tile(HW, per_lane_bytes, _VMEM_BUDGET_BYTES)
    n_t = HW // TL

    xpre3, out3 = pl.pallas_call(
        functools.partial(_fused_kernel, c_in=C_in),
        out_shape=(
            jax.ShapeDtypeStruct((B, C_in + 2, HW), x.dtype),
            jax.ShapeDtypeStruct((B, C_out, HW), x.dtype),
        ),
        grid=(B, n_t),
        in_specs=[
            pl.BlockSpec((None, C_in, TL), lambda b, t: (b, 0, t)),   # x
            pl.BlockSpec((2, TL), lambda b, t: (0, t)),               # pos (shared)
            pl.BlockSpec((C_in, 2), lambda b, t: (0, 0)),             # packed x-norm params
            pl.BlockSpec((C_out, C_in + 3), lambda b, t: (0, 0)),     # packed [W_eff | b_eff]
        ],
        out_specs=(
            pl.BlockSpec((None, C_in + 2, TL), lambda b, t: (b, 0, t)),  # xpre
            pl.BlockSpec((None, C_out, TL), lambda b, t: (b, 0, t)),     # decoded output
        ),
        compiler_params=pltpu.CompilerParams(
            dimension_semantics=("parallel", "parallel"),
            vmem_limit_bytes=32 * 1024 * 1024),
    )(x3, pos, self.x_params, self.wb)

    output = out3.reshape(B, C_out, H, W)          # free reshape back to NCHW
    data_dict = {
        "x": xpre3.reshape(B, C_in + 2, H, W),     # free reshape back to NCHW
        # out_normalizer.transform followed by inverse_transform is the
        # mathematical identity at levels=0: pass y straight through (matches
        # the reference FP round trip to ~1 ulp).
        "y": y,
    }
    return output, data_dict


def _reference(proc, x, y):
  """Plain-JAX reference of the same forward pass (for verification)."""
  B, C_in, H, W = x.shape
  C_out = y.shape[1]
  xm = proc.x_mean[:, 0].reshape(1, C_in, 1, 1)
  xs = proc.x_std[:, 0].reshape(1, C_in, 1, 1)
  ym = proc.y_mean[:, 0].reshape(1, C_out, 1, 1)
  ys = proc.y_std[:, 0].reshape(1, C_out, 1, 1)

  xn = (x - xm) / (xs + EPS)
  gi = jnp.broadcast_to((jnp.arange(H) / H)[None, None, :, None], (B, 1, H, W))
  gj = jnp.broadcast_to((jnp.arange(W) / W)[None, None, None, :], (B, 1, H, W))
  xp = jnp.concatenate([xn, gi.astype(x.dtype), gj.astype(x.dtype)], axis=1)

  out = jnp.einsum("oc,bchw->bohw", proc.weight, xp) + proc.bias[:, 0].reshape(1, C_out, 1, 1)
  out_dec = out * (ys + EPS) + ym

  yn = (y - ym) / (ys + EPS)
  y_dec = yn * (ys + EPS) + ym
  return out_dec, xp, y_dec


if __name__ == "__main__":
  key = jax.random.PRNGKey(0)
  k_proc, k_x, k_y = jax.random.split(key, 3)

  B, C_in, C_out, H, W = 2, 4, 4, 16, 16
  x = jax.random.normal(k_x, (B, C_in, H, W), dtype=jnp.float32)
  y = jax.random.normal(k_y, (B, C_out, H, W), dtype=jnp.float32)

  proc = MGPatchingDataProcessorPallas(
      levels=0, padding_fraction=0.0, stitching=False,
      in_channels=C_in, out_channels=C_out, key=k_proc)

  output, data_dict = proc.forward(x, y)
  output = jax.block_until_ready(output)
  data_dict = jax.tree_util.tree_map(jax.block_until_ready, data_dict)

  out_ref, xpre_ref, ydec_ref = _reference(proc, x, y)
  assert output.shape == (B, C_out, H, W)
  assert data_dict["x"].shape == (B, C_in + 2, H, W)
  assert data_dict["y"].shape == (B, C_out, H, W)
  assert jnp.allclose(output, out_ref, atol=1e-3, rtol=1e-3)
  assert jnp.allclose(data_dict["x"], xpre_ref, atol=1e-4, rtol=1e-4)
  assert jnp.allclose(data_dict["y"], ydec_ref, atol=1e-4, rtol=1e-4)

  print("KERNEL_OK")
</pallas_src>

<mosaic_0001>
module attributes {stable_mosaic.version = 11 : i64} {
  func.func @_fused_kernel(%arg0: i32, %arg1: i32, %arg2: memref<1x4x256xf32, #tpu.memory_space<vmem>>, %arg3: memref<2x256xf32, #tpu.memory_space<vmem>>, %arg4: memref<4x2xf32, #tpu.memory_space<vmem>>, %arg5: memref<4x7xf32, #tpu.memory_space<vmem>>, %arg6: memref<1x6x256xf32, #tpu.memory_space<vmem>>, %arg7: memref<1x4x256xf32, #tpu.memory_space<vmem>>) attributes {dimension_semantics = [#tpu.dimension_semantics<parallel>, #tpu.dimension_semantics<parallel>], iteration_bounds = array<i64: 2, 1>, scalar_prefetch = 0 : i64, scratch_operands = 0 : i64, tpu.core_type = #tpu.core_type<tc>, window_params = [{transform_indices = @transform_0, window_bounds = array<i64: 1, 4, 256>}, {transform_indices = @transform_1, window_bounds = array<i64: 2, 256>}, {pipeline_mode = #tpu.pipeline_mode<synchronous>, transform_indices = @transform_2, window_bounds = array<i64: 4, 2>}, {pipeline_mode = #tpu.pipeline_mode<synchronous>, transform_indices = @transform_3, window_bounds = array<i64: 4, 7>}, {transform_indices = @transform_4, window_bounds = array<i64: 1, 6, 256>}, {transform_indices = @transform_5, window_bounds = array<i64: 1, 4, 256>}]} {
    %c0 = arith.constant 0 : index
    %c0_0 = arith.constant 0 : index
    %0 = vector.load %arg4[%c0, %c0_0] : memref<4x2xf32, #tpu.memory_space<vmem>>, vector<4x2xf32>
    %1 = vector.extract_strided_slice %0 {offsets = [0, 0], sizes = [4, 1], strides = [1, 1]} : vector<4x2xf32> to vector<4x1xf32>
    %2 = vector.extract_strided_slice %0 {offsets = [0, 1], sizes = [4, 1], strides = [1, 1]} : vector<4x2xf32> to vector<4x1xf32>
    %c0_1 = arith.constant 0 : index
    %c0_2 = arith.constant 0 : index
    %c0_3 = arith.constant 0 : index
    %3 = vector.load %arg2[%c0_1, %c0_2, %c0_3] : memref<1x4x256xf32, #tpu.memory_space<vmem>>, vector<1x4x256xf32>
    %4 = vector.shape_cast %3 : vector<1x4x256xf32> to vector<4x256xf32>
    %5 = vector.broadcast %1 : vector<4x1xf32> to vector<4x256xf32>
    %6 = arith.mulf %4, %5 : vector<4x256xf32>
    %7 = vector.broadcast %2 : vector<4x1xf32> to vector<4x256xf32>
    %8 = arith.subf %6, %7 : vector<4x256xf32>
    %c0_4 = arith.constant 0 : index
    %c0_5 = arith.constant 0 : index
    %9 = vector.load %arg3[%c0_4, %c0_5] : memref<2x256xf32, #tpu.memory_space<vmem>>, vector<2x256xf32>
    %10 = tpu.concatenate %8, %9 in 0 : vector<4x256xf32>, vector<2x256xf32> -> vector<6x256xf32>
    %c0_6 = arith.constant 0 : index
    %c0_7 = arith.constant 0 : index
    %c0_8 = arith.constant 0 : index
    %11 = vector.load %arg6[%c0_6, %c0_7, %c0_8] : memref<1x6x256xf32, #tpu.memory_space<vmem>>, vector<1x6x256xf32>
    %12 = vector.shape_cast %11 : vector<1x6x256xf32> to vector<6x256xf32>
    %13 = vector.shape_cast %10 : vector<6x256xf32> to vector<1x6x256xf32>
    tpu.vector_store %arg6[%c0_6, %c0_7, %c0_8], %13 {strides = array<i32>} : memref<1x6x256xf32, #tpu.memory_space<vmem>>, vector<1x6x256xf32>,
    %c0_9 = arith.constant 0 : index
    %c0_10 = arith.constant 0 : index
    %14 = vector.load %arg5[%c0_9, %c0_10] : memref<4x7xf32, #tpu.memory_space<vmem>>, vector<4x7xf32>
    %15 = vector.extract_strided_slice %14 {offsets = [0, 0], sizes = [4, 6], strides = [1, 1]} : vector<4x7xf32> to vector<4x6xf32>
    %16 = vector.extract_strided_slice %14 {offsets = [0, 6], sizes = [4, 1], strides = [1, 1]} : vector<4x7xf32> to vector<4x1xf32>
    %cst = arith.constant dense<0.000000e+00> : vector<4x256xf32>
    %17 = tpu.matmul %15, %10, %cst {dimension_numbers = #tpu.dot_dimension_numbers<[1], [0], [0], [1], [0, 0, 1, 1], [], []>} : vector<4x6xf32>, vector<6x256xf32>, vector<4x256xf32> -> vector<4x256xf32>
    %18 = vector.broadcast %16 : vector<4x1xf32> to vector<4x256xf32>
    %19 = arith.addf %17, %18 : vector<4x256xf32>
    %c0_11 = arith.constant 0 : index
    %c0_12 = arith.constant 0 : index
    %c0_13 = arith.constant 0 : index
    %20 = vector.load %arg7[%c0_11, %c0_12, %c0_13] : memref<1x4x256xf32, #tpu.memory_space<vmem>>, vector<1x4x256xf32>
    %21 = vector.shape_cast %20 : vector<1x4x256xf32> to vector<4x256xf32>
    %22 = vector.shape_cast %19 : vector<4x256xf32> to vector<1x4x256xf32>
    tpu.vector_store %arg7[%c0_11, %c0_12, %c0_13], %22 {strides = array<i32>} : memref<1x4x256xf32, #tpu.memory_space<vmem>>, vector<1x4x256xf32>,
    return
  }
  func.func @transform_0(%arg0: i32, %arg1: i32) -> (i32, i32, i32) {
    %c0_i32 = arith.constant 0 : i32
    %c0_i32_0 = arith.constant 0 : i32
    return %arg0, %c0_i32, %arg1 : i32, i32, i32
  }
  func.func @transform_1(%arg0: i32, %arg1: i32) -> (i32, i32) {
    %c0_i32 = arith.constant 0 : i32
    %c0_i32_0 = arith.constant 0 : i32
    return %c0_i32, %arg1 : i32, i32
  }
  func.func @transform_2(%arg0: i32, %arg1: i32) -> (i32, i32) {
    %c0_i32 = arith.constant 0 : i32
    %c0_i32_0 = arith.constant 0 : i32
    %c0_i32_1 = arith.constant 0 : i32
    return %c0_i32, %c0_i32_0 : i32, i32
  }
  func.func @transform_3(%arg0: i32, %arg1: i32) -> (i32, i32) {
    %c0_i32 = arith.constant 0 : i32
    %c0_i32_0 = arith.constant 0 : i32
    %c0_i32_1 = arith.constant 0 : i32
    return %c0_i32, %c0_i32_0 : i32, i32
  }
  func.func @transform_4(%arg0: i32, %arg1: i32) -> (i32, i32, i32) {
    %c0_i32 = arith.constant 0 : i32
    %c0_i32_0 = arith.constant 0 : i32
    return %arg0, %c0_i32, %arg1 : i32, i32, i32
  }
  func.func @transform_5(%arg0: i32, %arg1: i32) -> (i32, i32, i32) {
    %c0_i32 = arith.constant 0 : i32
    %c0_i32_0 = arith.constant 0 : i32
    return %arg0, %c0_i32, %arg1 : i32, i32, i32
  }
}

</mosaic_0001>

<llo_original>
// kernel: tpu_custom_call.1
$region0: #{tpu_custom_call.1}
  #allocation0 [shape = 'u32[]', space=smem, size = 0x4, offset = 0x4, fixed_abs, tag = 'smem constant byte address 0x4 - core index']
  #allocation1 [shape = 'u32[144,128]{1,0:T(1,128)}', space=vmem, size = 0x12000, scoped, tag = 'internal scratch']
  %s0 = inlined_call_operand.hbm [shape: f32[2,4,256], index: 0, kind: input, shape index: {}]
  %s1 = inlined_call_operand.vmem [shape: f32[2,256], index: 1, kind: input, shape index: {}]
  %s2 = inlined_call_operand.vmem [shape: f32[4,2], index: 2, kind: input, shape index: {}]
  %s3 = inlined_call_operand.vmem [shape: f32[4,7], index: 3, kind: input, shape index: {}]
  %s4 = inlined_call_operand.vmem [shape: f32[2,6,256], index: 4, kind: output, shape index: {0}]
  %s5 = inlined_call_operand.hbm [shape: f32[2,4,256], index: 5, kind: output, shape index: {1}]
  %6 = xla_tuple %s4, %s5
  %s7 = sld [smem:[#allocation0]]
  $region61: #{tpu_custom_call.1} parent=0
    _
  %s9 = ssub.s32 1, %s7
  %s10 = scalar_select 0, %s9, %s7
  $region1: #{tpu_custom_call.1} parent=0
    #allocation2 [shape = 'u8[8192]{0}', space=vmem, size = 0x2000, scoped, tag = 'input window, operand 0']
    #allocation3 [shape = 's32[2]{0}', space=sflag, size = 0x8, scoped, tag = 'scoped memory for tpu_custom_call.1']
    #allocation4 [shape = 's32[2]{0}', space=sflag, size = 0x8, scoped, tag = 'scoped memory for tpu_custom_call.1']
    #allocation5 [shape = 'u8[8192]{0}', space=vmem, size = 0x2000, scoped, tag = 'output window, operand 1']
    %11 = vsyncpa [#allocation3], 0
    %s12 = scalar_lea.sflag [#allocation3], 1
    %13 = vsyncpa %s12, 0
    %14 = vsyncpa [#allocation4], 0
    %s15 = scalar_lea.sflag [#allocation4], 1
    %16 = vsyncpa %s15, 0
    loop: start=0, step=1, limit=4
    $region2: #{tpu_custom_call.1} parent=1 // loop_pre_header
      _
    $region3: #{tpu_custom_call.1} parent=1 // loop_header
      %s18 = sphi 0, %s22
      %p19 = scmp.ge.s32.totalorder %s18, 4
      %s25 = sphi 0, %s37
      %s26 = sphi 0, %s33
      %s27 = sphi 0, %s25
      %s28 = sphi 0, %s26
      %s29 = sphi 0, %s27
      %s30 = sphi 0, %s28
      %s42 = sphi 0, %s44
      %s45 = sphi 0, %s42
      %s46 = sphi 0, %s45
      %s62 = sphi 0, %s46
      %s68 = sphi 0, %s70
      %s71 = sphi 0, %s68
      %s72 = sphi 0, %s71
      %s88 = sphi 0, %s72
      %s92 = sphi 0, %s92
      %s94 = sphi 0, %s92
      %s95 = sphi 0, %s94
      %s109 = sphi 0, %s95
      %s113 = sphi 0, %s113
      %s115 = sphi 0, %s113
      %s116 = sphi 0, %s115
      %s130 = sphi 0, %s116
      %s138 = sphi 0, %s140
      %s141 = sphi 0, %s138
      %s142 = sphi 0, %s141
      %s158 = sphi 0, %s142
      %s166 = sphi 0, %s168
      %s169 = sphi 0, %s166
      %s170 = sphi 0, %s169
      %s186 = sphi 0, %s170
    $region4: #{tpu_custom_call.1} parent=1 // loop_header_branch
      %21 = sbr.rel (%p19) target = $region8
    $region5: #{tpu_custom_call.1} parent=1 // loop_body
      %s23 = ssub.s32 %s18, 1
      %s24 = ssub.s32 %s18, 2
      %s31 = sadd.s32 1, %s26
      %p32 = scmp.ge.s32.totalorder %s31, 1
      %s33 = scalar_select %p32, 0, %s31
      %s34 = sadd.s32 1, %s25
      %s35 = scalar_select %p32, %s34, %s25
      %p36 = scmp.ge.s32.totalorder %s35, 2
      %s37 = scalar_select %p36, 0, %s35
      %s38 = ssub.s32 %s25, %s37
      %s39 = ssub.s32 %s26, %s33
      %s40 = sor.u32 %s38, %s39
      %p41 = scmp.eq.s32.totalorder %s40, 0
      %s43 = sadd.s32 %s42, 1
      %s44 = scalar_select %p41, %s42, %s43
      %p47 = pneg %p41
      %p48 = scmp.eq.s32.totalorder %s18, 1
      %p49 = por %p47, %p48
      %p50 = scmp.ne.s32.totalorder %s42, %s45
      %p51 = scmp.eq.s32.totalorder %s18, 0
      %p52 = por %p50, %p51
      %p53 = scmp.ne.s32.totalorder %s42, %s45
      %p54 = scmp.eq.s32.totalorder %s23, 1
      %p55 = por %p53, %p54
      %p56 = scmp.ne.s32.totalorder %s45, %s46
      %p57 = scmp.eq.s32.totalorder %s23, 0
      %p58 = por %p56, %p57
      %p59 = scmp.ne.s32.totalorder %s45, %s46
      %p60 = scmp.eq.s32.totalorder %s24, 1
      %p61 = por %p59, %p60
      %p63 = scmp.ne.s32.totalorder %s46, %s62
      %p64 = scmp.eq.s32.totalorder %s24, 0
      %p65 = por %p63, %p64
      %s66 = ssub.s32 %s26, %s33
      %p67 = scmp.eq.s32.totalorder %s66, 0
      %s69 = sadd.s32 %s68, 1
      %s70 = scalar_select %p67, %s68, %s69
      %p73 = pneg %p67
      %p74 = scmp.eq.s32.totalorder %s18, 1
      %p75 = por %p73, %p74
      %p76 = scmp.ne.s32.totalorder %s68, %s71
      %p77 = scmp.eq.s32.totalorder %s18, 0
      %p78 = por %p76, %p77
      %p79 = scmp.ne.s32.totalorder %s68, %s71
      %p80 = scmp.eq.s32.totalorder %s23, 1
      %p81 = por %p79, %p80
      %p82 = scmp.ne.s32.totalorder %s71, %s72
      %p83 = scmp.eq.s32.totalorder %s23, 0
      %p84 = por %p82, %p83
      %p85 = scmp.ne.s32.totalorder %s71, %s72
      %p86 = scmp.eq.s32.totalorder %s24, 1
      %p87 = por %p85, %p86
      %p89 = scmp.ne.s32.totalorder %s72, %s88
      %p90 = scmp.eq.s32.totalorder %s24, 0
      %p91 = por %p89, %p90
      %s93 = sadd.s32 %s92, 1
      %p96 = scmp.eq.s32.totalorder %s18, 1
      %p97 = scmp.ne.s32.totalorder %s92, %s94
      %p98 = scmp.eq.s32.totalorder %s18, 0
      %p99 = por %p97, %p98
      %p100 = scmp.ne.s32.totalorder %s92, %s94
      %p101 = scmp.eq.s32.totalorder %s23, 1
      %p102 = por %p100, %p101
      %p103 = scmp.ne.s32.totalorder %s94, %s95
      %p104 = scmp.eq.s32.totalorder %s23, 0
      %p105 = por %p103, %p104
      %p106 = scmp.ne.s32.totalorder %s94, %s95
      %p107 = scmp.eq.s32.totalorder %s24, 1
      %p108 = por %p106, %p107
      %p110 = scmp.ne.s32.totalorder %s95, %s109
      %p111 = scmp.eq.s32.totalorder %s24, 0
      %p112 = por %p110, %p111
      %s114 = sadd.s32 %s113, 1
      %p117 = scmp.eq.s32.totalorder %s18, 1
      %p118 = scmp.ne.s32.totalorder %s113, %s115
      %p119 = scmp.eq.s32.totalorder %s18, 0
      %p120 = por %p118, %p119
      %p121 = scmp.ne.s32.totalorder %s113, %s115
      %p122 = scmp.eq.s32.totalorder %s23, 1
      %p123 = por %p121, %p122
      %p124 = scmp.ne.s32.totalorder %s115, %s116
      %p125 = scmp.eq.s32.totalorder %s23, 0
      %p126 = por %p124, %p125
      %p127 = scmp.ne.s32.totalorder %s115, %s116
      %p128 = scmp.eq.s32.totalorder %s24, 1
      %p129 = por %p127, %p128
      %p131 = scmp.ne.s32.totalorder %s116, %s130
      %p132 = scmp.eq.s32.totalorder %s24, 0
      %p133 = por %p131, %p132
      %s134 = ssub.s32 %s25, %s37
      %s135 = ssub.s32 %s26, %s33
      %s136 = sor.u32 %s134, %s135
      %p137 = scmp.eq.s32.totalorder %s136, 0
      %s139 = sadd.s32 %s138, 1
      %s140 = scalar_select %p137, %s138, %s139
      %p143 = pneg %p137
      %p144 = scmp.eq.s32.totalorder %s18, 1
      %p145 = por %p143, %p144
      %p146 = scmp.ne.s32.totalorder %s138, %s141
      %p147 = scmp.eq.s32.totalorder %s18, 0
      %p148 = por %p146, %p147
      %p149 = scmp.ne.s32.totalorder %s138, %s141
      %p150 = scmp.eq.s32.totalorder %s23, 1
      %p151 = por %p149, %p150
      %p152 = scmp.ne.s32.totalorder %s141, %s142
      %p153 = scmp.eq.s32.totalorder %s23, 0
      %p154 = por %p152, %p153
      %p155 = scmp.ne.s32.totalorder %s141, %s142
      %p156 = scmp.eq.s32.totalorder %s24, 1
      %p157 = por %p155, %p156
      %p159 = scmp.ne.s32.totalorder %s142, %s158
      %p160 = scmp.eq.s32.totalorder %s24, 0
      %p161 = por %p159, %p160
      %s162 = ssub.s32 %s25, %s37
      %s163 = ssub.s32 %s26, %s33
      %s164 = sor.u32 %s162, %s163
      %p165 = scmp.eq.s32.totalorder %s164, 0
      %s167 = sadd.s32 %s166, 1
      %s168 = scalar_select %p165, %s166, %s167
      %p171 = pneg %p165
      %p172 = scmp.eq.s32.totalorder %s18, 1
      %p173 = por %p171, %p172
      %p174 = scmp.ne.s32.totalorder %s166, %s169
      %p175 = scmp.eq.s32.totalorder %s18, 0
      %p176 = por %p174, %p175
      %p177 = scmp.ne.s32.totalorder %s166, %s169
      %p178 = scmp.eq.s32.totalorder %s23, 1
      %p179 = por %p177, %p178
      %p180 = scmp.ne.s32.totalorder %s169, %s170
      %p181 = scmp.eq.s32.totalorder %s23, 0
      %p182 = por %p180, %p181
      %p183 = scmp.ne.s32.totalorder %s169, %s170
      %p184 = scmp.eq.s32.totalorder %s24, 1
      %p185 = por %p183, %p184
      %p187 = scmp.ne.s32.totalorder %s170, %s186
      %p188 = scmp.eq.s32.totalorder %s24, 0
      %p189 = por %p187, %p188
      %p190 = scmp.le.s32.totalorder 1, %s18
      %p191 = scmp.lt.s32.totalorder %s18, 3
      %p192 = pnand %p190, %p191
      %p193 = pneg %p192
      // Predicated region
      $region9: #{tpu_custom_call.1} parent=5 // pred_check
        _
      $region10: #{tpu_custom_call.1} parent=5 // pred_check_branch
        %195 = sbr.rel (%p192) target = $region12
      $region11: #{tpu_custom_call.1} parent=5 // pred_region
        %s196 = ssub.s32 %s18, 1
        // Predicated region
        $region13: #{tpu_custom_call.1} parent=11 // pred_check
          %p197 = pneg %p84
        $region14: #{tpu_custom_call.1} parent=11 // pred_check_branch
          %199 = sbr.rel (%p197) target = $region16
        $region15: #{tpu_custom_call.1} parent=11 // pred_region
          %s200 = smul.u32 2, %s28
          %p201 = scmp.lt.s32.totalorder %s200, 1
          %s202 = scalar_select %p201, %s200, 1
          %s203 = smul.addr %s202, 2
          %s204 = scalar_lea.vmem %s1, %s203
          %s205 = smul.u32 2, %s28
        $region16: #{tpu_custom_call.1} parent=11 // pred_fallthru
          _
        // Predicated region
        $region17: #{tpu_custom_call.1} parent=11 // pred_check
          %p206 = pneg %p105
        $region18: #{tpu_custom_call.1} parent=11 // pred_check_branch
          %208 = sbr.rel (%p206) target = $region20
        $region19: #{tpu_custom_call.1} parent=11 // pred_region
          _
        $region20: #{tpu_custom_call.1} parent=11 // pred_fallthru
          _
        // Predicated region
        $region21: #{tpu_custom_call.1} parent=11 // pred_check
          %p209 = pneg %p126
        $region22: #{tpu_custom_call.1} parent=11 // pred_check_branch
          %211 = sbr.rel (%p209) target = $region24
        $region23: #{tpu_custom_call.1} parent=11 // pred_region
          _
        $region24: #{tpu_custom_call.1} parent=11 // pred_fallthru
          _
      $region12: #{tpu_custom_call.1} parent=5 // pred_fallthru
        _
      %p212 = scmp.lt.s32.totalorder %s18, 2
      // Predicated region
      $region25: #{tpu_custom_call.1} parent=5 // pred_check
        %p213 = pneg %p212
      $region26: #{tpu_custom_call.1} parent=5 // pred_check_branch
        %215 = sbr.rel (%p213) target = $region28
      $region27: #{tpu_custom_call.1} parent=5 // pred_region
        // Predicated region
        $region29: #{tpu_custom_call.1} parent=27 // pred_check
          %p216 = pneg %p52
        $region30: #{tpu_custom_call.1} parent=27 // pred_check_branch
          %218 = sbr.rel (%p216) target = $region32
        $region31: #{tpu_custom_call.1} parent=27 // pred_region
          %s219 = sand.u32 %s42, 1
          %s220 = scalar_lea.sflag [#allocation3], %s219
          %s221 = sand.u32 %s42, 1
          %s222 = smul.addr %s221, 8
          %s223 = scalar_lea.vmem [#allocation2], %s222
          %s224 = smul.u32 2, %s26
          %s226 = ssub.s32 128, 128
          %227 = vsyncadd %s220, %s226
          %s228 = smul.addr %s25, 2
          %s229 = sadd.s32 %s224, %s228
          %s230 = smul.addr %s229, 64
          %s231 = scalar_lea.hbm %s0, %s230
          %s233 = sshll.u32 %s223, 4
          %s234 = int_to_ptr.vmem [resolvable:$true] %s233
          %236 = dma.hbm_to_vmem [thread:$0]  %s231, 128, %s234, %s220
        $region32: #{tpu_custom_call.1} parent=27 // pred_fallthru
          _
      $region28: #{tpu_custom_call.1} parent=5 // pred_fallthru
        _
      %p237 = scmp.le.s32.totalorder 1, %s18
      %p238 = scmp.lt.s32.totalorder %s18, 3
      %p239 = pnand %p237, %p238
      %p240 = pneg %p239
      // Predicated region
      $region33: #{tpu_custom_call.1} parent=5 // pred_check
        _
      $region34: #{tpu_custom_call.1} parent=5 // pred_check_branch
        %242 = sbr.rel (%p239) target = $region36
      $region35: #{tpu_custom_call.1} parent=5 // pred_region
        %s243 = ssub.s32 %s18, 1
        %s244 = sand.u32 %s45, 1
        %s245 = scalar_lea.sflag [#allocation3], %s244
        %s246 = sand.u32 %s45, 1
        %s247 = smul.addr %s246, 8
        %s248 = scalar_lea.vmem [#allocation2], %s247
        // Predicated region
        $region37: #{tpu_custom_call.1} parent=35 // pred_check
          %p249 = pneg %p58
        $region38: #{tpu_custom_call.1} parent=35 // pred_check_branch
          %251 = sbr.rel (%p249) target = $region40
        $region39: #{tpu_custom_call.1} parent=35 // pred_region
          %252 = dma.done %s245, 128
        $region40: #{tpu_custom_call.1} parent=35 // pred_fallthru
          _
        %s253 = sand.u32 %s45, 1
        %s254 = scalar_lea.sflag [#allocation3], %s253
        %s255 = sand.u32 %s45, 1
        %s256 = smul.addr %s255, 8
        %s257 = scalar_lea.vmem [#allocation2], %s256
        %p258 = pneg %p58
        %p259 = pneg %p55
        %s260 = smul.u32 2, %s28
        %p261 = scmp.lt.s32.totalorder %s260, 1
        %s262 = scalar_select %p261, %s260, 1
        %s263 = smul.addr %s262, 2
        %s264 = scalar_lea.vmem %s1, %s263
        %p265 = pneg %p84
        %p266 = pneg %p81
        %p267 = pneg %p105
        %p268 = pneg %p102
        %p269 = pneg %p126
        %p270 = pneg %p123
        %p271 = pneg %p154
        %p272 = pneg %p151
        %s273 = smul.u32 2, %s28
        %p274 = scmp.lt.s32.totalorder %s27, 1
        %s275 = scalar_select %p274, %s27, 1
        %p276 = scmp.lt.s32.totalorder %s273, 1
        %s277 = scalar_select %p276, %s273, 1
        %s278 = smul.addr %s275, 2
        %s279 = sadd.s32 %s277, %s278
        %s280 = smul.addr %s279, 8
        %s281 = scalar_lea.vmem %s4, %s280
        %p282 = pneg %p182
        %p283 = pneg %p179
        %s284 = sand.u32 %s169, 1
        %s285 = scalar_lea.sflag [#allocation4], %s284
        %s286 = sand.u32 %s169, 1
        %s287 = smul.addr %s286, 8
        %s288 = scalar_lea.vmem [#allocation5], %s287
        %s289 = smul.u32 2, %s28
        %s290 = smul.u32 2, %s28
        %p291 = scmp.lt.s32.totalorder %s290, 1
        %s292 = scalar_select %p291, %s290, 1
        %s293 = smul.addr %s292, 2
        %s294 = scalar_lea.vmem %s1, %s293
        %s295 = smul.u32 2, %s28
        %s296 = smul.u32 2, %s28
        %p297 = scmp.lt.s32.totalorder %s27, 1
        %s298 = scalar_select %p297, %s27, 1
        %p299 = scmp.lt.s32.totalorder %s296, 1
        %s300 = scalar_select %p299, %s296, 1
        %s301 = smul.addr %s298, 2
        %s302 = sadd.s32 %s300, %s301
        %s303 = smul.addr %s302, 8
        %s304 = scalar_lea.vmem %s4, %s303
        %s305 = smul.u32 2, %s28
        %s306 = smul.u32 2, %s28
        %v307 = vld [vmem:[%s2] sm:$0xf]
        %v308 = vld [vmem:[%s248] sm:$0xff]
        %310 = vset.pattern.permute.xlu0 0
        %311 = vperm.xlu0 %310, %v307
        %v312 = vpop.permute.xlu0 %311
        %v314 = vunpack.c.l.s4 839922192
        %v315 = vunpack.c.0.s8 %v314
        %v316 = vlaneseq
        %v317 = vshrl.u32 %v316, 7
        %v318 = vsub.s32 %v315, %v317
        %v319 = vrot.slane %v312, %v318
        %v321 = vmul.f32 %v308, %v319
        %322 = vset.pattern.permute.xlu0 1
        %323 = vperm.xlu0 %322, %v307
        %v324 = vpop.permute.xlu0 %323
        %v326 = vunpack.c.l.s4 839922192
        %v327 = vunpack.c.0.s8 %v326
        %v328 = vlaneseq
        %v329 = vshrl.u32 %v328, 7
        %v330 = vsub.s32 %v327, %v329
        %v331 = vrot.slane %v324, %v330
        %v333 = vsub.f32 %v321, %v331
        %v334 = vld [vmem:[%s294] sm:$0xf]
        %v336 = vcombine.high %v333, %v333
        %v340 = vunpack.c.l.s4 1983009808
        %v341 = vunpack.c.0.s8 %v340
        %v342 = vlaneseq
        %v343 = vshrl.u32 %v342, 7
        %v344 = vsub.s32 %v341, %v343
        %v345 = vrot.slane %v334, %v344
        %v346 = vcombine.low %v345, %v345
        %vm349 = vcmask 1043456
        %v350 = vsel %vm349, %v333, %v346
        %v351 = vsel %vm349, %v336, %v345
        %352 = vst [vmem:[%s304] sm:$0x3f] %v350
        %353 = vst [vmem:[%s304 + $0x8] sm:$0x3f] %v351
        %v354 = vld [vmem:[%s3] sm:$0xf]
        %356 = vset.pattern.permute.xlu0 6
        %357 = vperm.xlu0 %356, %v354
        %v358 = vpop.permute.xlu0 %357
        %vm360 = vcmask 48128
        %v361 = vsel %vm360, %v354, 0
        %vm363 = vcmask 1045504
        %v365 = vsel %vm363, %v350, 0
        %v368 = vsel %vm363, %v351, 0
        %370 = vmatprep.subr.mxu0 0.0
        %371 = vmatpush1.msra.mxu0 0.0
        %372 = vmatprep.subr.mxu0 0.0
        %373 = vmatpush1.msra.mxu0 0.0
        %374 = vmatprep.subr.mxu0 0.0
        %375 = vmatpush1.msra.mxu0 0.0
        %376 = vmatprep.subr.mxu0 0.0
        %377 = vmatpush1.msra.mxu0 0.0
        %378 = vmatprep.subr.mxu0 0.0
        %379 = vmatpush1.msra.mxu0 0.0
        %380 = vmatprep.subr.mxu0 0.0
        %381 = vmatpush1.msra.mxu0 0.0
        %382 = vmatprep.subr.mxu0 0.0
        %383 = vmatpush1.msra.mxu0 0.0
        %384 = vmatprep.subr.mxu0 0.0
        %385 = vmatpush1.msra.mxu0 0.0
        %386 = vmatprep.subr.mxu0 0.0
        %387 = vmatpush1.msra.mxu0 0.0
        %388 = vmatprep.subr.mxu0 0.0
        %389 = vmatpush1.msra.mxu0 0.0
        %390 = vmatprep.subr.mxu0 0.0
        %391 = vmatpush1.msra.mxu0 0.0
        %392 = vmatprep.subr.mxu0 0.0
        %393 = vmatpush1.msra.mxu0 0.0
        %394 = vmatprep.subr.mxu0 0.0
        %395 = vmatpush1.msra.mxu0 0.0
        %396 = vmatprep.subr.mxu0 0.0
        %397 = vmatpush1.msra.mxu0 0.0
        %398 = vmatprep.subr.mxu0 0.0
        %399 = vmatpush1.msra.mxu0 0.0
        %400 = vmatprep.subr.mxu0 %v368
        %401 = vmatpush1.msra.mxu0 %v365
        %402 = vmatprep.subr.mxu0 0.0
        %403 = vmatpush2.msra.mxu0 0.0
        %404 = vmatprep.subr.mxu0 0.0
        %405 = vmatpush2.msra.mxu0 0.0
        %406 = vmatprep.subr.mxu0 0.0
        %407 = vmatpush2.msra.mxu0 0.0
        %408 = vmatprep.subr.mxu0 0.0
        %409 = vmatpush2.msra.mxu0 0.0
        %410 = vmatprep.subr.mxu0 0.0
        %411 = vmatpush2.msra.mxu0 0.0
        %412 = vmatprep.subr.mxu0 0.0
        %413 = vmatpush2.msra.mxu0 0.0
        %414 = vmatprep.subr.mxu0 0.0
        %415 = vmatpush2.msra.mxu0 0.0
        %416 = vmatprep.subr.mxu0 0.0
        %417 = vmatpush2.msra.mxu0 0.0
        %418 = vmatprep.subr.mxu0 0.0
        %419 = vmatpush2.msra.mxu0 0.0
        %420 = vmatprep.subr.mxu0 0.0
        %421 = vmatpush2.msra.mxu0 0.0
        %422 = vmatprep.subr.mxu0 0.0
        %423 = vmatpush2.msra.mxu0 0.0
        %424 = vmatprep.subr.mxu0 0.0
        %425 = vmatpush2.msra.mxu0 0.0
        %426 = vmatprep.subr.mxu0 0.0
        %427 = vmatpush2.msra.mxu0 0.0
        %428 = vmatprep.subr.mxu0 0.0
        %429 = vmatpush2.msra.mxu0 0.0
        %430 = vmatprep.subr.mxu0 0.0
        %431 = vmatpush2.msra.mxu0 0.0
        %432 = vmatprep.subr.mxu0 0.0
        %433 = vmatpush2.msra.mxu0 0.0
        %434 = vmatprep.mubr.f32.mxu0 0.0
        %435 = vmatmul.mubr.f32.gmra.mxu0 %v361
        %v436 = vpop.f32.mrf.mxu0
        %v437 = vadd.f32 %v358, %v436
        %v438 = vpop.f32.mrf.mxu0
        %v439 = vadd.f32 %v358, %v438
        %440 = vdwg.mxu0
        %v443 = vcombine.low %v437, %v439
        %445 = vst [vmem:[%s288] sm:$0xff] %v443
        %s446 = smul.u32 2, %s28
        %p447 = scmp.lt.s32.totalorder %s27, 1
        %s448 = scalar_select %p447, %s27, 1
        %p449 = scmp.lt.s32.totalorder %s446, 1
        %s450 = scalar_select %p449, %s446, 1
        %s451 = smul.addr %s448, 2
        %s452 = sadd.s32 %s450, %s451
        %s453 = smul.addr %s452, 8
        %s454 = scalar_lea.vmem %s4, %s453
        %s455 = sand.u32 %s169, 1
        %s456 = scalar_lea.sflag [#allocation4], %s455
        %s457 = sand.u32 %s169, 1
        %s458 = smul.addr %s457, 8
        %s459 = scalar_lea.vmem [#allocation5], %s458
        // Predicated region
        $region41: #{tpu_custom_call.1} parent=35 // pred_check
          %p460 = pneg %p151
        $region42: #{tpu_custom_call.1} parent=35 // pred_check_branch
          %462 = sbr.rel (%p460) target = $region44
        $region43: #{tpu_custom_call.1} parent=35 // pred_region
          %s463 = smul.u32 2, %s28
        $region44: #{tpu_custom_call.1} parent=35 // pred_fallthru
          _
        // Predicated region
        $region45: #{tpu_custom_call.1} parent=35 // pred_check
          %p464 = pneg %p179
        $region46: #{tpu_custom_call.1} parent=35 // pred_check_branch
          %466 = sbr.rel (%p464) target = $region48
        $region47: #{tpu_custom_call.1} parent=35 // pred_region
          %s467 = smul.u32 2, %s28
          %s469 = ssub.s32 128, 128
          %470 = vsyncadd %s456, %s469
          %s471 = smul.addr %s27, 2
          %s472 = sadd.s32 %s467, %s471
          %s473 = smul.addr %s472, 64
          %s474 = scalar_lea.hbm %s5, %s473
          %s476 = sshll.u32 %s459, 4
          %s477 = int_to_ptr.vmem [resolvable:$true] %s476
          %479 = dma.vmem_to_hbm [thread:$0]  %s477, 128, %s474, %s456
        $region48: #{tpu_custom_call.1} parent=35 // pred_fallthru
          _
      $region36: #{tpu_custom_call.1} parent=5 // pred_fallthru
        _
      %p480 = scmp.le.s32.totalorder 2, %s18
      // Predicated region
      $region49: #{tpu_custom_call.1} parent=5 // pred_check
        %p481 = pneg %p480
      $region50: #{tpu_custom_call.1} parent=5 // pred_check_branch
        %483 = sbr.rel (%p481) target = $region52
      $region51: #{tpu_custom_call.1} parent=5 // pred_region
        %s484 = ssub.s32 %s18, 2
        // Predicated region
        $region53: #{tpu_custom_call.1} parent=51 // pred_check
          %p485 = pneg %p157
        $region54: #{tpu_custom_call.1} parent=51 // pred_check_branch
          %487 = sbr.rel (%p485) target = $region56
        $region55: #{tpu_custom_call.1} parent=51 // pred_region
          %s488 = smul.u32 2, %s30
          %p489 = scmp.lt.s32.totalorder %s29, 1
          %s490 = scalar_select %p489, %s29, 1
          %p491 = scmp.lt.s32.totalorder %s488, 1
          %s492 = scalar_select %p491, %s488, 1
          %s493 = smul.addr %s490, 2
          %s494 = sadd.s32 %s492, %s493
          %s495 = smul.addr %s494, 8
          %s496 = scalar_lea.vmem %s4, %s495
        $region56: #{tpu_custom_call.1} parent=51 // pred_fallthru
          _
        // Predicated region
        $region57: #{tpu_custom_call.1} parent=51 // pred_check
          %p497 = pneg %p185
        $region58: #{tpu_custom_call.1} parent=51 // pred_check_branch
          %499 = sbr.rel (%p497) target = $region60
        $region59: #{tpu_custom_call.1} parent=51 // pred_region
          %s500 = sand.u32 %s170, 1
          %s501 = scalar_lea.sflag [#allocation4], %s500
          %s502 = sand.u32 %s170, 1
          %s503 = smul.addr %s502, 8
          %s504 = scalar_lea.vmem [#allocation5], %s503
          %505 = dma.done %s501, 128
        $region60: #{tpu_custom_call.1} parent=51 // pred_fallthru
          _
      $region52: #{tpu_custom_call.1} parent=5 // pred_fallthru
        _
    $region6: #{tpu_custom_call.1} parent=1 // loop_footer
      %s22 = sadd.s32 1, %s18
    $region7: #{tpu_custom_call.1} parent=1 // loop_footer_branch
      %17 = sbr.rel target = $region3
    $region8: #{tpu_custom_call.1} parent=1 // loop_exit
      _
    %506 = vsyncpa [#allocation3], 1
    %s507 = scalar_lea.sflag [#allocation3], 1
    %508 = vsyncpa %s507, 1
    %509 = vsyncpa [#allocation4], 1
    %s510 = scalar_lea.sflag [#allocation4], 1
    %511 = vsyncpa %s510, 1

</llo_original>
